<compile_context>
chip_gen: v6e
topology: v6e:2x2x1
jax: 0.10.0
libtpu: 0.0.40
codegen_flags: <defaults>
</compile_context>

<pallas_src>
import functools
import math

import jax
import jax.numpy as jnp
from jax import lax
from jax.experimental import pallas as pl
from jax.experimental.pallas import tpu as pltpu


def _round_up(x, m):
    return ((x + m - 1) // m) * m


def _bce_partial_kernel(pred_ref, tgt_ref, out_ref, *, row_tile, lane):
    p = pred_ref[...].astype(jnp.float32)
    t = tgt_ref[...].astype(jnp.float32)

    # PyTorch BCELoss clamps each log term at -100 for numerical safety.
    log_p = jnp.maximum(jnp.log(p), -100.0)
    log_1mp = jnp.maximum(jnp.log(1.0 - p), -100.0)
    loss = -(t * log_p + (1.0 - t) * log_1mp)

    # Reduce the (row_tile, lane) block to an (8, lane) partial sum using a
    # pairwise tree of sublane-aligned (8, lane) slices: pure VPU adds, no
    # cross-lane XLU work, short dependency chain, better numerics.
    parts = [
        lax.slice(loss, (k * 8, 0), (k * 8 + 8, lane))
        for k in range(row_tile // 8)
    ]
    while len(parts) > 1:
        nxt = [parts[i] + parts[i + 1] for i in range(0, len(parts) - 1, 2)]
        if len(parts) % 2:
            nxt.append(parts[-1])
        parts = nxt
    out_ref[...] = parts[0]


def bce_loss(pred, target, *, lane=512, max_row_tile=512):
    """pred, target: arrays of identical shape, pred in [0, 1].

    Returns the scalar mean BCE loss (torch.nn.BCELoss semantics)."""
    assert pred.shape == target.shape
    total = math.prod(pred.shape)

    pred_flat = pred.reshape(-1)
    tgt_flat = target.reshape(-1)

    # Sublane-dense layout: (rows, lane) with lane % 128 == 0, rows % 8 == 0.
    rows = pl.cdiv(total, lane)
    row_tile = min(max_row_tile, _round_up(max(rows, 8), 8))
    padded_rows = _round_up(rows, row_tile)
    padded_total = padded_rows * lane

    pad = padded_total - total
    if pad:
        # pred=1, target=1  ->  -(1*log(1) + 0*clamp(log(0))) = 0 loss.
        pred_flat = jnp.concatenate(
            [pred_flat, jnp.ones((pad,), dtype=pred_flat.dtype)]
        )
        tgt_flat = jnp.concatenate(
            [tgt_flat, jnp.ones((pad,), dtype=tgt_flat.dtype)]
        )

    pred_2d = pred_flat.reshape(padded_rows, lane)
    tgt_2d = tgt_flat.reshape(padded_rows, lane)

    num_blocks = padded_rows // row_tile

    kernel = functools.partial(
        _bce_partial_kernel, row_tile=row_tile, lane=lane
    )

    partials = pl.pallas_call(
        kernel,
        out_shape=jax.ShapeDtypeStruct((num_blocks * 8, lane), jnp.float32),
        grid_spec=pltpu.PrefetchScalarGridSpec(
            num_scalar_prefetch=0,
            grid=(num_blocks,),
            in_specs=[
                pl.BlockSpec((row_tile, lane), lambda j: (j, 0)),
                pl.BlockSpec((row_tile, lane), lambda j: (j, 0)),
            ],
            out_specs=pl.BlockSpec((8, lane), lambda j: (j, 0)),
        ),
        compiler_params=pltpu.CompilerParams(
            dimension_semantics=("parallel",),
        ),
    )(pred_2d, tgt_2d)

    # Tiny final reduction + mean in plain JAX (padding contributes 0 loss).
    return jnp.sum(partials) / jnp.float32(total)


if __name__ == "__main__":
    key = jax.random.PRNGKey(0)
    k1, k2 = jax.random.split(key)

    # Small NCHW shapes: batch=2, channels=4, spatial=16x16.
    shape = (2, 4, 16, 16)
    pred = jax.nn.sigmoid(jax.random.normal(k1, shape, dtype=jnp.float32))
    target = (jax.random.uniform(k2, shape) > 0.5).astype(jnp.float32)

    loss = bce_loss(pred, target)
    loss = jax.block_until_ready(loss)

    # Reference check in plain JAX (same clamped-log formula as torch BCELoss).
    p = pred.reshape(shape[0], -1).astype(jnp.float32)
    t = target.reshape(shape[0], -1).astype(jnp.float32)
    ref = jnp.mean(
        -(t * jnp.maximum(jnp.log(p), -100.0)
          + (1.0 - t) * jnp.maximum(jnp.log(1.0 - p), -100.0))
    )
    assert jnp.allclose(loss, ref, rtol=1e-5, atol=1e-6), (loss, ref)

    print("KERNEL_OK")
</pallas_src>

<mosaic_0001>
module attributes {stable_mosaic.version = 11 : i64} {
  func.func @_bce_partial_kernel(%arg0: i32, %arg1: memref<8x512xf32, #tpu.memory_space<vmem>>, %arg2: memref<8x512xf32, #tpu.memory_space<vmem>>, %arg3: memref<8x512xf32, #tpu.memory_space<vmem>>) attributes {dimension_semantics = [#tpu.dimension_semantics<parallel>], iteration_bounds = array<i64: 1>, scalar_prefetch = 0 : i64, scratch_operands = 0 : i64, tpu.core_type = #tpu.core_type<tc>, window_params = [{transform_indices = @transform_0, window_bounds = array<i64: 8, 512>}, {transform_indices = @transform_1, window_bounds = array<i64: 8, 512>}, {transform_indices = @transform_2, window_bounds = array<i64: 8, 512>}]} {
    %c0 = arith.constant 0 : index
    %c0_0 = arith.constant 0 : index
    %0 = vector.load %arg1[%c0, %c0_0] : memref<8x512xf32, #tpu.memory_space<vmem>>, vector<8x512xf32>
    %c0_1 = arith.constant 0 : index
    %c0_2 = arith.constant 0 : index
    %1 = vector.load %arg2[%c0_1, %c0_2] : memref<8x512xf32, #tpu.memory_space<vmem>>, vector<8x512xf32>
    %2 = math.log %0 : vector<8x512xf32>
    %cst = arith.constant -1.000000e+02 : f32
    %3 = vector.broadcast %cst : f32 to vector<8x512xf32>
    %4 = arith.maximumf %2, %3 : vector<8x512xf32>
    %cst_3 = arith.constant 1.000000e+00 : f32
    %5 = vector.broadcast %cst_3 : f32 to vector<8x512xf32>
    %6 = arith.subf %5, %0 : vector<8x512xf32>
    %7 = math.log %6 : vector<8x512xf32>
    %cst_4 = arith.constant -1.000000e+02 : f32
    %8 = vector.broadcast %cst_4 : f32 to vector<8x512xf32>
    %9 = arith.maximumf %7, %8 : vector<8x512xf32>
    %10 = arith.mulf %1, %4 : vector<8x512xf32>
    %cst_5 = arith.constant 1.000000e+00 : f32
    %11 = vector.broadcast %cst_5 : f32 to vector<8x512xf32>
    %12 = arith.subf %11, %1 : vector<8x512xf32>
    %13 = arith.mulf %12, %9 : vector<8x512xf32>
    %14 = arith.addf %10, %13 : vector<8x512xf32>
    %cst_6 = arith.constant 0.000000e+00 : f32
    %15 = vector.broadcast %cst_6 : f32 to vector<8x512xf32>
    %16 = arith.subf %15, %14 : vector<8x512xf32>
    %17 = vector.extract_strided_slice %16 {offsets = [0, 0], sizes = [8, 512], strides = [1, 1]} : vector<8x512xf32> to vector<8x512xf32>
    %c0_7 = arith.constant 0 : index
    %c0_8 = arith.constant 0 : index
    %18 = vector.load %arg3[%c0_7, %c0_8] : memref<8x512xf32, #tpu.memory_space<vmem>>, vector<8x512xf32>
    tpu.vector_store %arg3[%c0_7, %c0_8], %17 {strides = array<i32>} : memref<8x512xf32, #tpu.memory_space<vmem>>, vector<8x512xf32>,
    return
  }
  func.func @transform_0(%arg0: i32) -> (i32, i32) {
    %c0_i32 = arith.constant 0 : i32
    %c0_i32_0 = arith.constant 0 : i32
    return %arg0, %c0_i32 : i32, i32
  }
  func.func @transform_1(%arg0: i32) -> (i32, i32) {
    %c0_i32 = arith.constant 0 : i32
    %c0_i32_0 = arith.constant 0 : i32
    return %arg0, %c0_i32 : i32, i32
  }
  func.func @transform_2(%arg0: i32) -> (i32, i32) {
    %c0_i32 = arith.constant 0 : i32
    %c0_i32_0 = arith.constant 0 : i32
    return %arg0, %c0_i32 : i32, i32
  }
}

</mosaic_0001>

<llo_original>
// kernel: tpu_custom_call.1
$region0: #{tpu_custom_call.1}
  #allocation0 [shape = 'u32[]', space=smem, size = 0x4, offset = 0x4, fixed_abs, tag = 'smem constant byte address 0x4 - core index']
  #allocation1 [shape = 'u32[144,128]{1,0:T(1,128)}', space=vmem, size = 0x12000, scoped, tag = 'internal scratch']
  %s0 = inlined_call_operand.hbm [shape: f32[8,512], index: 0, kind: input, shape index: {}]
  %s1 = inlined_call_operand.hbm [shape: f32[8,512], index: 1, kind: input, shape index: {}]
  %s2 = inlined_call_operand.hbm [shape: f32[8,512], index: 2, kind: output, shape index: {}]
  %s3 = sld [smem:[#allocation0]]
  $region26: #{tpu_custom_call.1} parent=0
    _
  %s5 = ssub.s32 1, %s3
  %s6 = scalar_select 0, %s5, %s3
  $region1: #{tpu_custom_call.1} parent=0
    #allocation2 [shape = 'u8[16384]{0}', space=vmem, size = 0x4000, scoped, tag = 'input window, operand 0, single buffered']
    #allocation3 [shape = 's32[1]{0}', space=sflag, size = 0x4, scoped, tag = 'scoped memory for tpu_custom_call.1']
    #allocation4 [shape = 's32[1]{0}', space=sflag, size = 0x4, scoped, tag = 'scoped memory for tpu_custom_call.1']
    #allocation5 [shape = 'u8[16384]{0}', space=vmem, size = 0x4000, scoped, tag = 'input window, operand 1, single buffered']
    #allocation6 [shape = 's32[1]{0}', space=sflag, size = 0x4, scoped, tag = 'scoped memory for tpu_custom_call.1']
    #allocation7 [shape = 'u8[16384]{0}', space=vmem, size = 0x4000, scoped, tag = 'output window, operand 0, single buffered']
    %7 = vsyncpa [#allocation3], 0
    %8 = vsyncpa [#allocation6], 0
    %9 = vsyncpa [#allocation4], 0
    // Predicated region
    $region2: #{tpu_custom_call.1} parent=1 // pred_check
      _
    $region3: #{tpu_custom_call.1} parent=1 // pred_check_branch
      %11 = sbr.rel (0) target = $region5
    $region4: #{tpu_custom_call.1} parent=1 // pred_region
      %s13 = ssub.s32 512, 512
      %14 = vsyncadd [#allocation3], %s13
      %s16 = sshll.u32 [#allocation2], 4
      %s17 = int_to_ptr.vmem [resolvable:$true] %s16
      %19 = dma.hbm_to_vmem [thread:$0]  %s0, 512, %s17, [#allocation3]
    $region5: #{tpu_custom_call.1} parent=1 // pred_fallthru
      _
    // Predicated region
    $region6: #{tpu_custom_call.1} parent=1 // pred_check
      _
    $region7: #{tpu_custom_call.1} parent=1 // pred_check_branch
      %21 = sbr.rel (0) target = $region9
    $region8: #{tpu_custom_call.1} parent=1 // pred_region
      %s23 = ssub.s32 512, 512
      %24 = vsyncadd [#allocation6], %s23
      %s26 = sshll.u32 [#allocation5], 4
      %s27 = int_to_ptr.vmem [resolvable:$true] %s26
      %29 = dma.hbm_to_vmem [thread:$0]  %s1, 512, %s27, [#allocation6]
    $region9: #{tpu_custom_call.1} parent=1 // pred_fallthru
      _
    // Predicated region
    $region10: #{tpu_custom_call.1} parent=1 // pred_check
      _
    $region11: #{tpu_custom_call.1} parent=1 // pred_check_branch
      %31 = sbr.rel (0) target = $region13
    $region12: #{tpu_custom_call.1} parent=1 // pred_region
      %32 = dma.done [#allocation3], 512
    $region13: #{tpu_custom_call.1} parent=1 // pred_fallthru
      _
    // Predicated region
    $region14: #{tpu_custom_call.1} parent=1 // pred_check
      _
    $region15: #{tpu_custom_call.1} parent=1 // pred_check_branch
      %34 = sbr.rel (0) target = $region17
    $region16: #{tpu_custom_call.1} parent=1 // pred_region
      %35 = dma.done [#allocation6], 512
    $region17: #{tpu_custom_call.1} parent=1 // pred_fallthru
      _
    %v36 = vld [vmem:[#allocation2] sm:$0xff]
    %v37 = vld [vmem:[#allocation2 + $0x8] sm:$0xff]
    %v38 = vld [vmem:[#allocation2 + $0x10] sm:$0xff]
    %v39 = vld [vmem:[#allocation2 + $0x18] sm:$0xff]
    %v40 = vld [vmem:[#allocation5] sm:$0xff]
    %v41 = vld [vmem:[#allocation5 + $0x8] sm:$0xff]
    %v42 = vld [vmem:[#allocation5 + $0x10] sm:$0xff]
    %v43 = vld [vmem:[#allocation5 + $0x18] sm:$0xff]
    %v44 = vlog2.pop %v36
    %v45 = vmul.f32 %v44, 0.6931472
    %v46 = vlog2.pop %v37
    %v47 = vmul.f32 %v46, 0.6931472
    %v48 = vlog2.pop %v38
    %v49 = vmul.f32 %v48, 0.6931472
    %v50 = vlog2.pop %v39
    %v51 = vmul.f32 %v50, 0.6931472
    %v52 = vmax.f32 %v45, -100.0
    %v53 = vmax.f32 %v47, -100.0
    %v54 = vmax.f32 %v49, -100.0
    %v55 = vmax.f32 %v51, -100.0
    %v56 = vsub.f32 1.0, %v36
    %v57 = vsub.f32 1.0, %v37
    %v58 = vsub.f32 1.0, %v38
    %v59 = vsub.f32 1.0, %v39
    %v60 = vlog2.pop %v56
    %v61 = vmul.f32 %v60, 0.6931472
    %v62 = vlog2.pop %v57
    %v63 = vmul.f32 %v62, 0.6931472
    %v64 = vlog2.pop %v58
    %v65 = vmul.f32 %v64, 0.6931472
    %v66 = vlog2.pop %v59
    %v67 = vmul.f32 %v66, 0.6931472
    %v68 = vmax.f32 %v61, -100.0
    %v69 = vmax.f32 %v63, -100.0
    %v70 = vmax.f32 %v65, -100.0
    %v71 = vmax.f32 %v67, -100.0
    %v72 = vmul.f32 %v40, %v52
    %v73 = vmul.f32 %v41, %v53
    %v74 = vmul.f32 %v42, %v54
    %v75 = vmul.f32 %v43, %v55
    %v76 = vsub.f32 1.0, %v40
    %v77 = vsub.f32 1.0, %v41
    %v78 = vsub.f32 1.0, %v42
    %v79 = vsub.f32 1.0, %v43
    %v80 = vmul.f32 %v76, %v68
    %v81 = vmul.f32 %v77, %v69
    %v82 = vmul.f32 %v78, %v70
    %v83 = vmul.f32 %v79, %v71
    %v84 = vadd.f32 %v72, %v80
    %v85 = vadd.f32 %v73, %v81
    %v86 = vadd.f32 %v74, %v82
    %v87 = vadd.f32 %v75, %v83
    %v88 = vsub.f32 0.0, %v84
    %v89 = vsub.f32 0.0, %v85
    %v90 = vsub.f32 0.0, %v86
    %v91 = vsub.f32 0.0, %v87
    %92 = vst [vmem:[#allocation7] sm:$0xff] %v88
    %93 = vst [vmem:[#allocation7 + $0x8] sm:$0xff] %v89
    %94 = vst [vmem:[#allocation7 + $0x10] sm:$0xff] %v90
    %95 = vst [vmem:[#allocation7 + $0x18] sm:$0xff] %v91
    // Predicated region
    $region18: #{tpu_custom_call.1} parent=1 // pred_check
      _
    $region19: #{tpu_custom_call.1} parent=1 // pred_check_branch
      %97 = sbr.rel (0) target = $region21
    $region20: #{tpu_custom_call.1} parent=1 // pred_region
      %s99 = ssub.s32 512, 512
      %100 = vsyncadd [#allocation4], %s99
      %s102 = sshll.u32 [#allocation7], 4
      %s103 = int_to_ptr.vmem [resolvable:$true] %s102
      %105 = dma.vmem_to_hbm [thread:$0]  %s103, 512, %s2, [#allocation4]
    $region21: #{tpu_custom_call.1} parent=1 // pred_fallthru
      _
    // Predicated region
    $region22: #{tpu_custom_call.1} parent=1 // pred_check
      _
    $region23: #{tpu_custom_call.1} parent=1 // pred_check_branch
      %107 = sbr.rel (0) target = $region25
    $region24: #{tpu_custom_call.1} parent=1 // pred_region
      %108 = dma.done [#allocation4], 512
    $region25: #{tpu_custom_call.1} parent=1 // pred_fallthru
      _
    %109 = vsyncpa [#allocation3], 1
    %110 = vsyncpa [#allocation6], 1
    %111 = vsyncpa [#allocation4], 1

</llo_original>
